<compile_context>
chip_gen: v7x
topology: tpu7x:2x2x1
jax: 0.10.0
libtpu: 0.0.40
codegen_flags: <defaults>
</compile_context>

<pallas_src>
import functools

import jax
import jax.numpy as jnp
from jax.experimental import pallas as pl
from jax.experimental.pallas import tpu as pltpu


# ------------------------- hardware-aware sizing ------------------------------

@functools.lru_cache(maxsize=None)
def _vmem_capacity_bytes():
    """Physical VMEM per TensorCore (64 MiB v7x, 128 MiB v5e/v6e)."""
    try:
        cap = getattr(pltpu.get_tpu_info(), "vmem_capacity_bytes", None)
        if cap:
            return int(cap)
    except Exception:
        pass
    return 64 * 1024 * 1024          # conservative (v7x-sized) fallback


@functools.lru_cache(maxsize=None)
def _vmem_limit_bytes():
    """Mosaic scoped-VMEM limit: ~3/4 of physical (48 MiB v7x, 96 MiB v5e/v6e)."""
    return int(min(_vmem_capacity_bytes() * 3 // 4, 112 * 1024 * 1024))


@functools.lru_cache(maxsize=None)
def _tensorcores_per_chip():
    """2 TensorCores on v7x, 1 on v5e/v6e.  Probe TpuInfo; fall back to a VMEM
    heuristic (v7x is the 64 MiB/TC generation)."""
    try:
        info = pltpu.get_tpu_info()
        for attr in ("num_cores", "tensorcore_count", "num_tensorcores",
                     "cores_per_chip"):
            v = getattr(info, attr, None)
            if v:
                return int(v)
    except Exception:
        pass
    return 2 if _vmem_capacity_bytes() <= 80 * 1024 * 1024 else 1


# ----------------------------- tiling helpers --------------------------------

def _round_up(x, m):
    return ((x + m - 1) // m) * m


def _pick_tile(dim, target, align):
    """Return (tile, padded_dim): tile is align-aligned, <= target whenever
    possible, and divides padded_dim (>= dim).  Prefers exact aligned divisors
    (no padding); otherwise pads instead of falling back to one giant block."""
    if dim <= target:
        t = _round_up(max(dim, 1), align)
        return t, t
    tgt = max(align, (target // align) * align)
    t = tgt
    while t >= align:
        if dim % t == 0:
            return t, dim
        t -= align
    return tgt, _round_up(dim, tgt)


def _cap_rows_for_megacore(m, target):
    """On dual-TC chips keep >=2 row tiles so both TensorCores get work."""
    if _tensorcores_per_chip() >= 2 and m >= 16:
        target = min(target, max(8, ((m // 2) // 8) * 8))
    return target


def _pad_rows(x, rows):
    if x.shape[0] == rows:
        return x
    return jnp.pad(x, ((0, rows - x.shape[0]), (0, 0)))


def _as_bf16(x):
    return x if x.dtype == jnp.bfloat16 else x.astype(jnp.bfloat16)


# ----------------------------- output_layer ----------------------------------

def _output_layer_kernel(feat_ref, w_ref, out_ref):
    # feat_ref: (tm, E) bf16   w_ref: (tn, E) bf16 (vocab rows, untransposed)
    # out_ref:  (tm, tn)       -- logits = feat @ w_tile.T, f32 MXU accumulator
    out_ref[...] = jax.lax.dot_general(
        feat_ref[...],
        w_ref[...],
        dimension_numbers=(((1,), (1,)), ((), ())),
        preferred_element_type=jnp.float32,
    ).astype(out_ref.dtype)


def output_layer(features, embed_weight, *, tm=1024, tn=512,
                 out_dtype=jnp.float32):
    """logits = features @ embed_weight.T  (fairseq tied-weight projection).

    features:     (M, E)  (any float dtype; cast to bf16 for the MXU)
    embed_weight: (V, E)  (kept in native layout; no transpose materialized)
    returns:      (M, V) `out_dtype` logits
    """
    M, E = features.shape
    V, E2 = embed_weight.shape
    assert E == E2

    feat = _as_bf16(features)
    w = _as_bf16(embed_weight)

    limit = _vmem_limit_bytes()
    budget = int(limit * 0.8)                     # headroom for compiler scratch
    out_bytes = jnp.dtype(out_dtype).itemsize

    tn, V_pad = _pick_tile(V, tn, 128)            # lane-aligned vocab tile
    # Weight double buffers are fixed cost; per-row: 2 feat (bf16) + 2 out bufs.
    w_bytes = 2 * tn * E * 2
    per_row = 2 * E * 2 + 2 * tn * out_bytes
    tm_cap = max(8, (budget - w_bytes) // per_row)
    tm_target = _cap_rows_for_megacore(M, min(tm, tm_cap))
    tm, M_pad = _pick_tile(M, tm_target, 8)

    feat = _pad_rows(feat, M_pad)                 # zero rows -> sliced off
    w = _pad_rows(w, V_pad)                       # zero vocab rows -> sliced off

    grid = (M_pad // tm, V_pad // tn)

    out = pl.pallas_call(
        _output_layer_kernel,
        out_shape=jax.ShapeDtypeStruct((M_pad, V_pad), out_dtype),
        grid_spec=pltpu.PrefetchScalarGridSpec(
            num_scalar_prefetch=0,
            grid=grid,
            in_specs=[
                # feature tile resident across the vocab axis (index depends on i only)
                pl.BlockSpec((tm, E), lambda i, j: (i, 0)),
                pl.BlockSpec((tn, E), lambda i, j: (j, 0)),
            ],
            out_specs=pl.BlockSpec((tm, tn), lambda i, j: (i, j)),
        ),
        compiler_params=pltpu.CompilerParams(
            dimension_semantics=("parallel", "parallel"),
            vmem_limit_bytes=limit,
        ),
    )(feat, w)

    if M_pad != M or V_pad != V:
        out = out[:M, :V]
    return out


# --------------------------- get_normalized_probs ----------------------------

def _normalize_kernel(logits_ref, out_ref, *, log_probs, approx):
    x = logits_ref[...].astype(jnp.float32)          # (tm, V), f32 softmax math
    m = jnp.max(x, axis=-1, keepdims=True)
    s = x - m
    e = jnp.exp(s)
    denom = jnp.sum(e, axis=-1, keepdims=True)
    if log_probs:
        y = s - jnp.log(denom)
    else:
        inv = pl.reciprocal(denom, approx=True) if approx else 1.0 / denom
        y = e * inv
    out_ref[...] = y.astype(out_ref.dtype)


def get_normalized_probs(logits, *, log_probs, tm=512, out_dtype=None,
                         approx_reciprocal=True):
    """(log_)softmax over the last (vocab) axis. logits: (M, V), any float dtype."""
    M, V = logits.shape
    out_dtype = logits.dtype if out_dtype is None else out_dtype
    in_b = jnp.dtype(logits.dtype).itemsize
    out_b = jnp.dtype(out_dtype).itemsize

    limit = _vmem_limit_bytes()
    budget = int(limit * 0.8)
    # 2 double-buffered input blocks + 2 output blocks + ~4 f32 temporaries/row.
    bytes_per_row = (2 * in_b + 2 * out_b + 16) * V
    tm_cap = max(8, budget // bytes_per_row)
    tm, M_pad = _pick_tile(M, min(tm, tm_cap), 8)

    x = _pad_rows(logits, M_pad)                     # zero rows -> sliced off
    grid = (M_pad // tm,)

    out = pl.pallas_call(
        functools.partial(_normalize_kernel, log_probs=log_probs,
                          approx=approx_reciprocal),
        out_shape=jax.ShapeDtypeStruct((M_pad, V), out_dtype),
        grid_spec=pltpu.PrefetchScalarGridSpec(
            num_scalar_prefetch=0,
            grid=grid,
            in_specs=[pl.BlockSpec((tm, V), lambda i: (i, 0))],
            out_specs=pl.BlockSpec((tm, V), lambda i: (i, 0)),
        ),
        compiler_params=pltpu.CompilerParams(
            dimension_semantics=("parallel",),
            vmem_limit_bytes=limit,
        ),
    )(x)
    return out[:M] if M_pad != M else out


# ---------------- fused vocab projection + softmax (decode path) -------------

def _fused_project_normalize_kernel(feat_ref, w_ref, out_ref, m_ref, l_ref, *,
                                    log_probs, tn, v_real, v_pad, approx):
    # grid = (row tiles [parallel], vocab tiles [arbitrary]).
    # out_ref: (tm, V_pad) resident block -- holds raw logits during the vocab
    #          sweep, finalized in place on the last vocab step.
    # m_ref/l_ref: (tm, 1) f32 online-softmax running max / running sum.
    j = pl.program_id(1)
    nj = pl.num_programs(1)

    @pl.when(j == 0)
    def _init():
        m_ref[...] = jnp.full(m_ref.shape, -jnp.inf, m_ref.dtype)
        l_ref[...] = jnp.zeros(l_ref.shape, l_ref.dtype)

    s = jax.lax.dot_general(                              # (tm, tn) f32
        feat_ref[...],
        w_ref[...],
        dimension_numbers=(((1,), (1,)), ((), ())),
        preferred_element_type=jnp.float32,
    )
    if v_pad != v_real:
        # Mask padded vocab columns out of the softmax statistics.
        cols = jax.lax.broadcasted_iota(jnp.int32, s.shape, 1) + j * tn
        s = jnp.where(cols < v_real, s, -1e30)

    col = pl.multiple_of(j * tn, 128)
    out_ref[:, pl.ds(col, tn)] = s.astype(out_ref.dtype)  # logits stay in VMEM

    # Online softmax statistics (no logits slab kept anywhere else).
    m_prev = m_ref[...]
    m_new = jnp.maximum(m_prev, jnp.max(s, axis=-1, keepdims=True))
    l_ref[...] = (l_ref[...] * jnp.exp(m_prev - m_new)
                  + jnp.sum(jnp.exp(s - m_new), axis=-1, keepdims=True))
    m_ref[...] = m_new

    @pl.when(j == nj - 1)
    def _finalize():
        m = m_ref[...]
        if log_probs:
            shift = m + jnp.log(l_ref[...])
        else:
            inv = (pl.reciprocal(l_ref[...], approx=True) if approx
                   else 1.0 / l_ref[...])

        # Normalize one (tm, tn) tile at a time: bounded vreg live ranges,
        # no giant unrolled epilogue when nj is large.
        def body(jj, carry):
            c = pl.multiple_of(jj * tn, 128)
            x = out_ref[:, pl.ds(c, tn)].astype(jnp.float32)
            if log_probs:
                y = x - shift
            else:
                y = jnp.exp(x - m) * inv
            out_ref[:, pl.ds(c, tn)] = y.astype(out_ref.dtype)
            return carry

        jax.lax.fori_loop(0, nj, body, 0)


def fused_project_normalize(features, embed_weight, *, log_probs, tm=512, tn=512,
                            out_dtype=jnp.float32, approx_reciprocal=True):
    """Normalized probs directly from features: softmax(features @ W.T).

    Logits never hit HBM: the only full-width logits copy is the resident
    (tm, V) output block in VMEM (saves 2 of 3 full HBM passes over (M, V)).
    """
    M, E = features.shape
    V, E2 = embed_weight.shape
    assert E == E2

    feat = _as_bf16(features)
    w = _as_bf16(embed_weight)

    limit = _vmem_limit_bytes()
    budget = int(limit * 0.8)
    out_b = jnp.dtype(out_dtype).itemsize

    tn, V_pad = _pick_tile(V, tn, 128)
    nj = V_pad // tn

    # Fixed cost: weight double buffers.  Per row: resident output (counted
    # twice for buffering safety), 2 feat buffers (bf16), the f32 matmul tile,
    # and the (tm, 1) stats scratches.
    w_bytes = 2 * tn * E * 2
    per_row = 2 * V_pad * out_b + 2 * E * 2 + 2 * tn * 4 + 16
    tm_cap = max(8, (budget - w_bytes) // per_row)
    tm_target = _cap_rows_for_megacore(M, min(tm, tm_cap))
    tm, M_pad = _pick_tile(M, tm_target, 8)

    feat = _pad_rows(feat, M_pad)
    w = _pad_rows(w, V_pad)

    grid = (M_pad // tm, nj)

    out = pl.pallas_call(
        functools.partial(_fused_project_normalize_kernel, log_probs=log_probs,
                          tn=tn, v_real=V, v_pad=V_pad, approx=approx_reciprocal),
        out_shape=jax.ShapeDtypeStruct((M_pad, V_pad), out_dtype),
        grid_spec=pltpu.PrefetchScalarGridSpec(
            num_scalar_prefetch=0,
            grid=grid,
            in_specs=[
                pl.BlockSpec((tm, E), lambda i, j: (i, 0)),   # resident across j
                pl.BlockSpec((tn, E), lambda i, j: (j, 0)),   # streamed weight
            ],
            out_specs=pl.BlockSpec((tm, V_pad), lambda i, j: (i, 0)),
            scratch_shapes=[pltpu.VMEM((tm, 1), jnp.float32),   # running max
                            pltpu.VMEM((tm, 1), jnp.float32)],  # running sum
        ),
        compiler_params=pltpu.CompilerParams(
            dimension_semantics=("parallel", "arbitrary"),
            vmem_limit_bytes=limit,
        ),
    )(feat, w)

    if M_pad != M or V_pad != V:
        out = out[:M, :V]
    return out


# --------------------------------- decoder -----------------------------------

class FairseqDecoderPallas:
    """Minimal concrete FairseqDecoder with Pallas hot paths."""

    def __init__(self, vocab_size, embed_dim, key):
        self.vocab_size = vocab_size
        self.embed_dim = embed_dim
        # nn.Embedding-style weight, deterministic init (f32 master copy).
        self.embed_weight = (
            jax.random.normal(key, (vocab_size, embed_dim), dtype=jnp.float32) * 0.02
        )
        # bf16 copy stored once: halves gather/weight HBM traffic and feeds the
        # MXU directly.  All hot paths read this one.
        self.embed_weight_bf16 = self.embed_weight.astype(jnp.bfloat16)
        # TODO(synk): optional int8 (v5e/v6e) / fp8 (v7x) weight path would
        #             halve the dominant V*E HBM stream again.

    def extract_features(self, prev_output_tokens, encoder_out=None):
        # (B, T) int32 -> (B, T, E) bf16 gather straight from the bf16 table:
        # half the gather HBM traffic, no separate astype pass before the MXU.
        # TODO(synk): extract_features is NotImplementedError in the base class;
        #             an embedding lookup stands in for a concrete decoder body.
        feats = jnp.take(self.embed_weight_bf16, prev_output_tokens, axis=0)
        return feats, {"encoder_out": encoder_out}

    def output_layer(self, features):
        B, T, E = features.shape
        logits = output_layer(features.reshape(B * T, E), self.embed_weight_bf16)
        return logits.reshape(B, T, self.vocab_size)

    def forward(self, prev_output_tokens, encoder_out=None):
        feats, extra = self.extract_features(prev_output_tokens, encoder_out)
        return self.output_layer(feats), extra

    def get_normalized_probs(self, net_output, log_probs, sample=None):
        # TODO(synk): no adaptive_softmax branch; plain (log_)softmax path only.
        logits = net_output[0]
        B, T, V = logits.shape
        out = get_normalized_probs(logits.reshape(B * T, V), log_probs=log_probs)
        return out.reshape(B, T, V)

    def get_normalized_probs_fused(self, prev_output_tokens, log_probs):
        # Decode-path fusion: tokens -> normalized probs without HBM logits.
        feats, _ = self.extract_features(prev_output_tokens)
        B, T, E = feats.shape
        out = fused_project_normalize(
            feats.reshape(B * T, E), self.embed_weight_bf16, log_probs=log_probs
        )
        return out.reshape(B, T, self.vocab_size)

    def max_positions(self):
        return 1e6

    def upgrade_state_dict(self, state_dict):
        return state_dict


# ----------------------------------- main -------------------------------------

if __name__ == "__main__":
    B, T, E, V = 2, 8, 128, 256

    key = jax.random.PRNGKey(0)
    k_emb, k_tok = jax.random.split(key)

    decoder = FairseqDecoderPallas(vocab_size=V, embed_dim=E, key=k_emb)
    prev_output_tokens = jax.random.randint(k_tok, (B, T), 0, V, dtype=jnp.int32)

    logits, extra = decoder.forward(prev_output_tokens, encoder_out=None)
    log_probs = decoder.get_normalized_probs((logits, extra), log_probs=True)
    probs = decoder.get_normalized_probs((logits, extra), log_probs=False)
    fused_log_probs = decoder.get_normalized_probs_fused(prev_output_tokens, log_probs=True)
    fused_probs = decoder.get_normalized_probs_fused(prev_output_tokens, log_probs=False)

    jax.block_until_ready((logits, log_probs, probs, fused_log_probs, fused_probs))

    # Reference uses the same bf16-input / f32-accumulate math as the kernels.
    feats_ref = jnp.take(decoder.embed_weight, prev_output_tokens, axis=0)
    logits_ref = jnp.einsum(
        "bte,ve->btv",
        feats_ref.astype(jnp.bfloat16),
        decoder.embed_weight.astype(jnp.bfloat16),
        preferred_element_type=jnp.float32,
    )
    log_probs_ref = jax.nn.log_softmax(logits_ref, axis=-1)
    probs_ref = jax.nn.softmax(logits_ref, axis=-1)

    assert logits.shape == (B, T, V)
    assert jnp.allclose(logits, logits_ref, atol=1e-4, rtol=1e-3)
    assert jnp.allclose(log_probs, log_probs_ref, atol=1e-4, rtol=1e-3)
    assert jnp.allclose(probs, probs_ref, atol=2e-3, rtol=1e-2)
    assert jnp.allclose(fused_log_probs, log_probs_ref, atol=1e-4, rtol=1e-3)
    assert jnp.allclose(fused_probs, probs_ref, atol=2e-3, rtol=1e-2)

    print("KERNEL_OK")
</pallas_src>

<mosaic_0001>
module attributes {stable_mosaic.version = 11 : i64} {
  func.func @_output_layer_kernel(%arg0: i32, %arg1: i32, %arg2: memref<8x128xbf16, #tpu.memory_space<vmem>>, %arg3: memref<256x128xbf16, #tpu.memory_space<vmem>>, %arg4: memref<8x256xf32, #tpu.memory_space<vmem>>) attributes {dimension_semantics = [#tpu.dimension_semantics<parallel>, #tpu.dimension_semantics<parallel>], iteration_bounds = array<i64: 2, 1>, scalar_prefetch = 0 : i64, scratch_operands = 0 : i64, tpu.core_type = #tpu.core_type<tc>, window_params = [{transform_indices = @transform_0, window_bounds = array<i64: 8, 128>}, {transform_indices = @transform_1, window_bounds = array<i64: 256, 128>}, {transform_indices = @transform_2, window_bounds = array<i64: 8, 256>}]} {
    %c0 = arith.constant 0 : index
    %c0_0 = arith.constant 0 : index
    %0 = vector.load %arg2[%c0, %c0_0] : memref<8x128xbf16, #tpu.memory_space<vmem>>, vector<8x128xbf16>
    %c0_1 = arith.constant 0 : index
    %c0_2 = arith.constant 0 : index
    %1 = vector.load %arg3[%c0_1, %c0_2] : memref<256x128xbf16, #tpu.memory_space<vmem>>, vector<256x128xbf16>
    %cst = arith.constant dense<0.000000e+00> : vector<8x256xf32>
    %2 = tpu.matmul %0, %1, %cst {dimension_numbers = #tpu.dot_dimension_numbers<[1], [1], [0], [0], [0, 0, 1, 0], [], []>} : vector<8x128xbf16>, vector<256x128xbf16>, vector<8x256xf32> -> vector<8x256xf32>
    %c0_3 = arith.constant 0 : index
    %c0_4 = arith.constant 0 : index
    %3 = vector.load %arg4[%c0_3, %c0_4] : memref<8x256xf32, #tpu.memory_space<vmem>>, vector<8x256xf32>
    tpu.vector_store %arg4[%c0_3, %c0_4], %2 {strides = array<i32>} : memref<8x256xf32, #tpu.memory_space<vmem>>, vector<8x256xf32>,
    return
  }
  func.func @transform_0(%arg0: i32, %arg1: i32) -> (i32, i32) {
    %c0_i32 = arith.constant 0 : i32
    %c0_i32_0 = arith.constant 0 : i32
    return %arg0, %c0_i32 : i32, i32
  }
  func.func @transform_1(%arg0: i32, %arg1: i32) -> (i32, i32) {
    %c0_i32 = arith.constant 0 : i32
    %c0_i32_0 = arith.constant 0 : i32
    return %arg1, %c0_i32 : i32, i32
  }
  func.func @transform_2(%arg0: i32, %arg1: i32) -> (i32, i32) {
    %c0_i32 = arith.constant 0 : i32
    return %arg0, %arg1 : i32, i32
  }
}

</mosaic_0001>

<llo_original>
// kernel: tpu_custom_call.1
$region0: #{tpu_custom_call.1}
  #allocation0 [shape = 'u32[]', space=smem, size = 0x4, offset = 0x4, fixed_abs, tag = 'smem constant byte address 0x4 - core index']
  #allocation1 [shape = 'u32[144,128]{1,0:T(1,128)}', space=vmem, size = 0x12000, scoped, tag = 'internal scratch']
  %s0 = inlined_call_operand.hbm [shape: bf16[16,128], index: 0, kind: input, shape index: {}]
  %s1 = inlined_call_operand.hbm [shape: bf16[256,128], index: 1, kind: input, shape index: {}]
  %s2 = inlined_call_operand.hbm [shape: f32[16,256], index: 2, kind: output, shape index: {}]
  %s3 = sld [smem:[#allocation0]]
  $region49: #{tpu_custom_call.1} parent=0
    _
  %s5 = ssub.s32 1, %s3
  %s6 = scalar_select 0, %s5, %s3
  $region1: #{tpu_custom_call.1} parent=0
    #allocation2 [shape = 'u8[4096]{0}', space=vmem, size = 0x1000, scoped, tag = 'input window, operand 0']
    #allocation3 [shape = 's32[2]{0}', space=sflag, size = 0x8, scoped, tag = 'scoped memory for tpu_custom_call.1']
    #allocation4 [shape = 's32[2]{0}', space=sflag, size = 0x8, scoped, tag = 'scoped memory for tpu_custom_call.1']
    #allocation5 [shape = 'u8[65536]{0}', space=vmem, size = 0x10000, scoped, tag = 'input window, operand 1, single buffered']
    #allocation6 [shape = 's32[1]{0}', space=sflag, size = 0x4, scoped, tag = 'scoped memory for tpu_custom_call.1']
    #allocation7 [shape = 'u8[16384]{0}', space=vmem, size = 0x4000, scoped, tag = 'output window, operand 0']
    %7 = vsyncpa [#allocation3], 0
    %s8 = scalar_lea.sflag [#allocation3], 1
    %9 = vsyncpa %s8, 0
    %10 = vsyncpa [#allocation6], 0
    %11 = vsyncpa [#allocation4], 0
    %s12 = scalar_lea.sflag [#allocation4], 1
    %13 = vsyncpa %s12, 0
    loop: start=0, step=1, limit=4
    $region2: #{tpu_custom_call.1} parent=1 // loop_pre_header
      _
    $region3: #{tpu_custom_call.1} parent=1 // loop_header
      %s15 = sphi 0, %s19
      %p16 = scmp.ge.s32.totalorder %s15, 4
      %s22 = sphi 0, %s34
      %s23 = sphi 0, %s30
      %s24 = sphi 0, %s22
      %s25 = sphi 0, %s23
      %s26 = sphi 0, %s24
      %s27 = sphi 0, %s25
      %s37 = sphi 0, %s39
      %s40 = sphi 0, %s37
      %s41 = sphi 0, %s40
      %s57 = sphi 0, %s41
      %s63 = sphi 0, %s65
      %s66 = sphi 0, %s63
      %s67 = sphi 0, %s66
      %s83 = sphi 0, %s67
      %s91 = sphi 0, %s93
      %s94 = sphi 0, %s91
      %s95 = sphi 0, %s94
      %s111 = sphi 0, %s95
    $region4: #{tpu_custom_call.1} parent=1 // loop_header_branch
      %18 = sbr.rel (%p16) target = $region8
    $region5: #{tpu_custom_call.1} parent=1 // loop_body
      %s20 = ssub.s32 %s15, 1
      %s21 = ssub.s32 %s15, 2
      %s28 = sadd.s32 1, %s23
      %p29 = scmp.ge.s32.totalorder %s28, 1
      %s30 = scalar_select %p29, 0, %s28
      %s31 = sadd.s32 1, %s22
      %s32 = scalar_select %p29, %s31, %s22
      %p33 = scmp.ge.s32.totalorder %s32, 2
      %s34 = scalar_select %p33, 0, %s32
      %s35 = ssub.s32 %s22, %s34
      %p36 = scmp.eq.s32.totalorder %s35, 0
      %s38 = sadd.s32 %s37, 1
      %s39 = scalar_select %p36, %s37, %s38
      %p42 = pneg %p36
      %p43 = scmp.eq.s32.totalorder %s15, 1
      %p44 = por %p42, %p43
      %p45 = scmp.ne.s32.totalorder %s37, %s40
      %p46 = scmp.eq.s32.totalorder %s15, 0
      %p47 = por %p45, %p46
      %p48 = scmp.ne.s32.totalorder %s37, %s40
      %p49 = scmp.eq.s32.totalorder %s20, 1
      %p50 = por %p48, %p49
      %p51 = scmp.ne.s32.totalorder %s40, %s41
      %p52 = scmp.eq.s32.totalorder %s20, 0
      %p53 = por %p51, %p52
      %p54 = scmp.ne.s32.totalorder %s40, %s41
      %p55 = scmp.eq.s32.totalorder %s21, 1
      %p56 = por %p54, %p55
      %p58 = scmp.ne.s32.totalorder %s41, %s57
      %p59 = scmp.eq.s32.totalorder %s21, 0
      %p60 = por %p58, %p59
      %s61 = ssub.s32 %s23, %s30
      %p62 = scmp.eq.s32.totalorder %s61, 0
      %s64 = sadd.s32 %s63, 1
      %s65 = scalar_select %p62, %s63, %s64
      %p68 = pneg %p62
      %p69 = scmp.eq.s32.totalorder %s15, 1
      %p70 = por %p68, %p69
      %p71 = scmp.ne.s32.totalorder %s63, %s66
      %p72 = scmp.eq.s32.totalorder %s15, 0
      %p73 = por %p71, %p72
      %p74 = scmp.ne.s32.totalorder %s63, %s66
      %p75 = scmp.eq.s32.totalorder %s20, 1
      %p76 = por %p74, %p75
      %p77 = scmp.ne.s32.totalorder %s66, %s67
      %p78 = scmp.eq.s32.totalorder %s20, 0
      %p79 = por %p77, %p78
      %p80 = scmp.ne.s32.totalorder %s66, %s67
      %p81 = scmp.eq.s32.totalorder %s21, 1
      %p82 = por %p80, %p81
      %p84 = scmp.ne.s32.totalorder %s67, %s83
      %p85 = scmp.eq.s32.totalorder %s21, 0
      %p86 = por %p84, %p85
      %s87 = ssub.s32 %s22, %s34
      %s88 = ssub.s32 %s23, %s30
      %s89 = sor.u32 %s87, %s88
      %p90 = scmp.eq.s32.totalorder %s89, 0
      %s92 = sadd.s32 %s91, 1
      %s93 = scalar_select %p90, %s91, %s92
      %p96 = pneg %p90
      %p97 = scmp.eq.s32.totalorder %s15, 1
      %p98 = por %p96, %p97
      %p99 = scmp.ne.s32.totalorder %s91, %s94
      %p100 = scmp.eq.s32.totalorder %s15, 0
      %p101 = por %p99, %p100
      %p102 = scmp.ne.s32.totalorder %s91, %s94
      %p103 = scmp.eq.s32.totalorder %s20, 1
      %p104 = por %p102, %p103
      %p105 = scmp.ne.s32.totalorder %s94, %s95
      %p106 = scmp.eq.s32.totalorder %s20, 0
      %p107 = por %p105, %p106
      %p108 = scmp.ne.s32.totalorder %s94, %s95
      %p109 = scmp.eq.s32.totalorder %s21, 1
      %p110 = por %p108, %p109
      %p112 = scmp.ne.s32.totalorder %s95, %s111
      %p113 = scmp.eq.s32.totalorder %s21, 0
      %p114 = por %p112, %p113
      %p115 = scmp.le.s32.totalorder 1, %s15
      %p116 = scmp.lt.s32.totalorder %s15, 3
      %p117 = pnand %p115, %p116
      %p118 = pneg %p117
      // Predicated region
      $region9: #{tpu_custom_call.1} parent=5 // pred_check
        _
      $region10: #{tpu_custom_call.1} parent=5 // pred_check_branch
        %120 = sbr.rel (%p117) target = $region12
      $region11: #{tpu_custom_call.1} parent=5 // pred_region
        %s121 = ssub.s32 %s15, 1
        // Predicated region
        $region13: #{tpu_custom_call.1} parent=11 // pred_check
          %p122 = pneg %p79
        $region14: #{tpu_custom_call.1} parent=11 // pred_check_branch
          %124 = sbr.rel (%p122) target = $region16
        $region15: #{tpu_custom_call.1} parent=11 // pred_region
          %s125 = smul.u32 32, %s25
          %s127 = ssub.s32 2048, 2048
          %128 = vsyncadd [#allocation6], %s127
          %s129 = smul.addr %s125, 64
          %s130 = scalar_lea.hbm %s1, %s129
          %s131 = sshll.u32 [#allocation5], 4
          %s132 = int_to_ptr.vmem [resolvable:$true] %s131
          %137 = dma.hbm_to_vmem [thread:$0]  %s130, 2048, %s132, [#allocation6], 64, 64, 4
        $region16: #{tpu_custom_call.1} parent=11 // pred_fallthru
          _
      $region12: #{tpu_custom_call.1} parent=5 // pred_fallthru
        _
      %p138 = scmp.lt.s32.totalorder %s15, 2
      // Predicated region
      $region17: #{tpu_custom_call.1} parent=5 // pred_check
        %p139 = pneg %p138
      $region18: #{tpu_custom_call.1} parent=5 // pred_check_branch
        %141 = sbr.rel (%p139) target = $region20
      $region19: #{tpu_custom_call.1} parent=5 // pred_region
        // Predicated region
        $region21: #{tpu_custom_call.1} parent=19 // pred_check
          %p142 = pneg %p47
        $region22: #{tpu_custom_call.1} parent=19 // pred_check_branch
          %144 = sbr.rel (%p142) target = $region24
        $region23: #{tpu_custom_call.1} parent=19 // pred_region
          %s145 = sand.u32 %s37, 1
          %s146 = scalar_lea.sflag [#allocation3], %s145
          %s147 = sand.u32 %s37, 1
          %s148 = smul.addr %s147, 4
          %s149 = scalar_lea.vmem [#allocation2], %s148
          %s151 = ssub.s32 64, 64
          %152 = vsyncadd %s146, %s151
          %s153 = smul.addr %s22, 64
          %s154 = scalar_lea.hbm %s0, %s153
          %s156 = sshll.u32 %s149, 4
          %s157 = int_to_ptr.vmem [resolvable:$true] %s156
          %159 = dma.hbm_to_vmem [thread:$0]  %s154, 64, %s157, %s146
        $region24: #{tpu_custom_call.1} parent=19 // pred_fallthru
          _
      $region20: #{tpu_custom_call.1} parent=5 // pred_fallthru
        _
      %p160 = scmp.le.s32.totalorder 1, %s15
      %p161 = scmp.lt.s32.totalorder %s15, 3
      %p162 = pnand %p160, %p161
      %p163 = pneg %p162
      // Predicated region
      $region25: #{tpu_custom_call.1} parent=5 // pred_check
        _
      $region26: #{tpu_custom_call.1} parent=5 // pred_check_branch
        %165 = sbr.rel (%p162) target = $region28
      $region27: #{tpu_custom_call.1} parent=5 // pred_region
        %s166 = ssub.s32 %s15, 1
        %s167 = sand.u32 %s40, 1
        %s168 = scalar_lea.sflag [#allocation3], %s167
        %s169 = sand.u32 %s40, 1
        %s170 = smul.addr %s169, 4
        %s171 = scalar_lea.vmem [#allocation2], %s170
        // Predicated region
        $region29: #{tpu_custom_call.1} parent=27 // pred_check
          %p172 = pneg %p53
        $region30: #{tpu_custom_call.1} parent=27 // pred_check_branch
          %174 = sbr.rel (%p172) target = $region32
        $region31: #{tpu_custom_call.1} parent=27 // pred_region
          %175 = dma.done %s168, 64
        $region32: #{tpu_custom_call.1} parent=27 // pred_fallthru
          _
        // Predicated region
        $region33: #{tpu_custom_call.1} parent=27 // pred_check
          %p176 = pneg %p79
        $region34: #{tpu_custom_call.1} parent=27 // pred_check_branch
          %178 = sbr.rel (%p176) target = $region36
        $region35: #{tpu_custom_call.1} parent=27 // pred_region
          %179 = dma.done [#allocation6], 2048
        $region36: #{tpu_custom_call.1} parent=27 // pred_fallthru
          _
        %s180 = sand.u32 %s40, 1
        %s181 = scalar_lea.sflag [#allocation3], %s180
        %s182 = sand.u32 %s40, 1
        %s183 = smul.addr %s182, 4
        %s184 = scalar_lea.vmem [#allocation2], %s183
        %p185 = pneg %p53
        %p186 = pneg %p50
        %p187 = pneg %p79
        %p188 = pneg %p76
        %p189 = pneg %p107
        %p190 = pneg %p104
        %s191 = sand.u32 %s94, 1
        %s192 = scalar_lea.sflag [#allocation4], %s191
        %s193 = sand.u32 %s94, 1
        %s194 = smul.addr %s193, 16
        %s195 = scalar_lea.vmem [#allocation7], %s194
        %s196 = smul.u32 32, %s25
        %s197 = smul.u32 2, %s25
        %v199 = vld [vmem:[%s171] sm:$0xf]
        %v200 = vld [vmem:[#allocation5] sm:$0xf]
        %v201 = vld [vmem:[#allocation5 + $0x4] sm:$0xf]
        %v202 = vld [vmem:[#allocation5 + $0x8] sm:$0xf]
        %v203 = vld [vmem:[#allocation5 + $0xc] sm:$0xf]
        %v204 = vld [vmem:[#allocation5 + $0x10] sm:$0xf]
        %v205 = vld [vmem:[#allocation5 + $0x14] sm:$0xf]
        %v206 = vld [vmem:[#allocation5 + $0x18] sm:$0xf]
        %v207 = vld [vmem:[#allocation5 + $0x1c] sm:$0xf]
        %v208 = vld [vmem:[#allocation5 + $0x20] sm:$0xf]
        %v209 = vld [vmem:[#allocation5 + $0x24] sm:$0xf]
        %v210 = vld [vmem:[#allocation5 + $0x28] sm:$0xf]
        %v211 = vld [vmem:[#allocation5 + $0x2c] sm:$0xf]
        %v212 = vld [vmem:[#allocation5 + $0x30] sm:$0xf]
        %v213 = vld [vmem:[#allocation5 + $0x34] sm:$0xf]
        %v214 = vld [vmem:[#allocation5 + $0x38] sm:$0xf]
        %v215 = vld [vmem:[#allocation5 + $0x3c] sm:$0xf]
        %v216 = vld [vmem:[#allocation5 + $0x40] sm:$0xf]
        %v217 = vld [vmem:[#allocation5 + $0x44] sm:$0xf]
        %v218 = vld [vmem:[#allocation5 + $0x48] sm:$0xf]
        %v219 = vld [vmem:[#allocation5 + $0x4c] sm:$0xf]
        %v220 = vld [vmem:[#allocation5 + $0x50] sm:$0xf]
        %v221 = vld [vmem:[#allocation5 + $0x54] sm:$0xf]
        %v222 = vld [vmem:[#allocation5 + $0x58] sm:$0xf]
        %v223 = vld [vmem:[#allocation5 + $0x5c] sm:$0xf]
        %v224 = vld [vmem:[#allocation5 + $0x60] sm:$0xf]
        %v225 = vld [vmem:[#allocation5 + $0x64] sm:$0xf]
        %v226 = vld [vmem:[#allocation5 + $0x68] sm:$0xf]
        %v227 = vld [vmem:[#allocation5 + $0x6c] sm:$0xf]
        %v228 = vld [vmem:[#allocation5 + $0x70] sm:$0xf]
        %v229 = vld [vmem:[#allocation5 + $0x74] sm:$0xf]
        %v230 = vld [vmem:[#allocation5 + $0x78] sm:$0xf]
        %v231 = vld [vmem:[#allocation5 + $0x7c] sm:$0xf]
        %v264 = vunpack.c.l.b16 %v200
        %v265 = vunpack.c.l.b16 %v201
        %v266 = vunpack.c.l.b16 %v202
        %v267 = vunpack.c.l.b16 %v203
        %v268 = vunpack.c.l.b16 %v204
        %v269 = vunpack.c.l.b16 %v205
        %v270 = vunpack.c.l.b16 %v206
        %v271 = vunpack.c.l.b16 %v207
        %v272 = vunpack.c.l.b16 %v208
        %v273 = vunpack.c.l.b16 %v209
        %v274 = vunpack.c.l.b16 %v210
        %v275 = vunpack.c.l.b16 %v211
        %v276 = vunpack.c.l.b16 %v212
        %v277 = vunpack.c.l.b16 %v213
        %v278 = vunpack.c.l.b16 %v214
        %v279 = vunpack.c.l.b16 %v215
        %v280 = vunpack.c.l.b16 %v216
        %v281 = vunpack.c.l.b16 %v217
        %v282 = vunpack.c.l.b16 %v218
        %v283 = vunpack.c.l.b16 %v219
        %v284 = vunpack.c.l.b16 %v220
        %v285 = vunpack.c.l.b16 %v221
        %v286 = vunpack.c.l.b16 %v222
        %v287 = vunpack.c.l.b16 %v223
        %v288 = vunpack.c.l.b16 %v224
        %v289 = vunpack.c.l.b16 %v225
        %v290 = vunpack.c.l.b16 %v226
        %v291 = vunpack.c.l.b16 %v227
        %v292 = vunpack.c.l.b16 %v228
        %v293 = vunpack.c.l.b16 %v229
        %v294 = vunpack.c.l.b16 %v230
        %v295 = vunpack.c.l.b16 %v231
        %v296 = vpack.c.b16 %v265, %v264
        %v297 = vpack.c.b16 %v267, %v266
        %v298 = vpack.c.b16 %v269, %v268
        %v299 = vpack.c.b16 %v271, %v270
        %v300 = vpack.c.b16 %v273, %v272
        %v301 = vpack.c.b16 %v275, %v274
        %v302 = vpack.c.b16 %v277, %v276
        %v303 = vpack.c.b16 %v279, %v278
        %v304 = vpack.c.b16 %v281, %v280
        %v305 = vpack.c.b16 %v283, %v282
        %v306 = vpack.c.b16 %v285, %v284
        %v307 = vpack.c.b16 %v287, %v286
        %v308 = vpack.c.b16 %v289, %v288
        %v309 = vpack.c.b16 %v291, %v290
        %v310 = vpack.c.b16 %v293, %v292
        %v311 = vpack.c.b16 %v295, %v294
        %328 = vmatprep.subr.bf16.mxu0 0
        %329 = vmatpush1.bf16.xpose.msra.mxu0 %v296
        %330 = vmatprep.subr.bf16.mxu0 0
        %331 = vmatpush1.bf16.xpose.msra.mxu0 %v297
        %332 = vmatprep.subr.bf16.mxu0 0
        %333 = vmatpush1.bf16.xpose.msra.mxu0 %v298
        %334 = vmatprep.subr.bf16.mxu0 0
        %335 = vmatpush1.bf16.xpose.msra.mxu0 %v299
        %336 = vmatprep.subr.bf16.mxu0 0
        %337 = vmatpush1.bf16.xpose.msra.mxu0 %v300
        %338 = vmatprep.subr.bf16.mxu0 0
        %339 = vmatpush1.bf16.xpose.msra.mxu0 %v301
        %340 = vmatprep.subr.bf16.mxu0 0
        %341 = vmatpush1.bf16.xpose.msra.mxu0 %v302
        %342 = vmatprep.subr.bf16.mxu0 0
        %343 = vmatpush1.bf16.xpose.msra.mxu0 %v303
        %344 = vmatprep.subr.bf16.mxu0 0
        %345 = vmatpush1.bf16.xpose.msra.mxu0 %v304
        %346 = vmatprep.subr.bf16.mxu0 0
        %347 = vmatpush1.bf16.xpose.msra.mxu0 %v305
        %348 = vmatprep.subr.bf16.mxu0 0
        %349 = vmatpush1.bf16.xpose.msra.mxu0 %v306
        %350 = vmatprep.subr.bf16.mxu0 0
        %351 = vmatpush1.bf16.xpose.msra.mxu0 %v307
        %352 = vmatprep.subr.bf16.mxu0 0
        %353 = vmatpush1.bf16.xpose.msra.mxu0 %v308
        %354 = vmatprep.subr.bf16.mxu0 0
        %355 = vmatpush1.bf16.xpose.msra.mxu0 %v309
        %356 = vmatprep.subr.bf16.mxu0 0
        %357 = vmatpush1.bf16.xpose.msra.mxu0 %v310
        %358 = vmatprep.subr.bf16.mxu0 0
        %359 = vmatpush1.bf16.xpose.msra.mxu0 %v311
        %360 = vmatprep.mubr.bf16.mxu0 0
        %361 = vmatmul.mubr.bf16.gmra.mrb[0].mxu0 %v199
        %v362 = vpop.f32.mrb[0].mxu0
        %v363 = vadd.f32 0.0, %v362
        %v364 = vpop.f32.mrb[0].mxu0
        %v365 = vadd.f32 0.0, %v364
        %v366 = vpop.f32.mrb[0].mxu0
        %v367 = vpop.f32.mrb[0].mxu0
        %368 = vdwg.mxu0
        %369 = vst [vmem:[%s195] sm:$0xff] %v363
        %370 = vst [vmem:[%s195 + $0x8] sm:$0xff] %v365
        %s371 = sand.u32 %s94, 1
        %s372 = scalar_lea.sflag [#allocation4], %s371
        %s373 = sand.u32 %s94, 1
        %s374 = smul.addr %s373, 16
        %s375 = scalar_lea.vmem [#allocation7], %s374
        // Predicated region
        $region37: #{tpu_custom_call.1} parent=27 // pred_check
          %p376 = pneg %p104
        $region38: #{tpu_custom_call.1} parent=27 // pred_check_branch
          %378 = sbr.rel (%p376) target = $region40
        $region39: #{tpu_custom_call.1} parent=27 // pred_region
          %s379 = smul.u32 2, %s25
          %s381 = ssub.s32 256, 256
          %382 = vsyncadd %s372, %s381
          %s383 = smul.addr %s24, 2
          %s384 = sadd.s32 %s379, %s383
          %s385 = smul.addr %s384, 128
          %s386 = scalar_lea.hbm %s2, %s385
          %s388 = sshll.u32 %s375, 4
          %s389 = int_to_ptr.vmem [resolvable:$true] %s388
          %391 = dma.vmem_to_hbm [thread:$0]  %s389, 256, %s386, %s372
        $region40: #{tpu_custom_call.1} parent=27 // pred_fallthru
          _
      $region28: #{tpu_custom_call.1} parent=5 // pred_fallthru
        _
      %p392 = scmp.le.s32.totalorder 2, %s15
      // Predicated region
      $region41: #{tpu_custom_call.1} parent=5 // pred_check
        %p393 = pneg %p392
      $region42: #{tpu_custom_call.1} parent=5 // pred_check_branch
        %395 = sbr.rel (%p393) target = $region44
      $region43: #{tpu_custom_call.1} parent=5 // pred_region
        %s396 = ssub.s32 %s15, 2
        // Predicated region
        $region45: #{tpu_custom_call.1} parent=43 // pred_check
          %p397 = pneg %p110
        $region46: #{tpu_custom_call.1} parent=43 // pred_check_branch
          %399 = sbr.rel (%p397) target = $region48
        $region47: #{tpu_custom_call.1} parent=43 // pred_region
          %s400 = sand.u32 %s95, 1
          %s401 = scalar_lea.sflag [#allocation4], %s400
          %s402 = sand.u32 %s95, 1
          %s403 = smul.addr %s402, 16
          %s404 = scalar_lea.vmem [#allocation7], %s403
          %405 = dma.done %s401, 256
        $region48: #{tpu_custom_call.1} parent=43 // pred_fallthru
          _
      $region44: #{tpu_custom_call.1} parent=5 // pred_fallthru
        _
    $region6: #{tpu_custom_call.1} parent=1 // loop_footer
      %s19 = sadd.s32 1, %s15
    $region7: #{tpu_custom_call.1} parent=1 // loop_footer_branch
      %14 = sbr.rel target = $region3
    $region8: #{tpu_custom_call.1} parent=1 // loop_exit
      _
    %406 = vsyncpa [#allocation3], 1
    %s407 = scalar_lea.sflag [#allocation3], 1
    %408 = vsyncpa %s407, 1
    %409 = vsyncpa [#allocation6], 1
    %410 = vsyncpa [#allocation4], 1
    %s411 = scalar_lea.sflag [#allocation4], 1
    %412 = vsyncpa %s411, 1

</llo_original>
